<compile_context>
chip_gen: v6e
topology: v6e:2x2x1
jax: 0.10.0
libtpu: 0.0.40
codegen_flags: <defaults>
</compile_context>

<pallas_src>
import jax
import jax.numpy as jnp
from jax import lax
from jax.experimental import pallas as pl
from jax.experimental.pallas import tpu as pltpu


# ----------------------------------------------------------------------------
# In-kernel math helpers
# ----------------------------------------------------------------------------
_SQRT1_2 = 0.7071067811865476


def _erf(x):
    # TODO(synk): lax.erf has no guaranteed Mosaic lowering; use the
    # Abramowitz&Stegun 7.1.26 rational approximation (|err| < 1.5e-7 ~ f32 eps)
    # built only from exp/mul/add/where, with the divide on the EUP slot.
    a1, a2, a3, a4, a5 = 0.254829592, -0.284496736, 1.421413741, -1.453152027, 1.061405429
    p = 0.3275911
    sgn = jnp.where(x >= 0.0, 1.0, -1.0)
    z = jnp.abs(x)
    t = pl.reciprocal(1.0 + p * z, approx=True)
    poly = ((((a5 * t + a4) * t + a3) * t + a2) * t + a1) * t
    return sgn * (1.0 - poly * jnp.exp(-z * z))


def _gelu_exact(x):
    # nn.GELU() default (erf-based).
    return 0.5 * x * (1.0 + _erf(x * _SQRT1_2))


# ----------------------------------------------------------------------------
# Pallas kernels
# ----------------------------------------------------------------------------
def _matmul_bias_kernel(x_ref, w_ref, b_ref, o_ref):
    o_ref[...] = (jnp.dot(x_ref[...], w_ref[...], preferred_element_type=jnp.float32)
                  + b_ref[...]).astype(o_ref.dtype)


def _fnet_blocks_head_kernel(x_ref, kr_ref, ki_ref, ch_ref, sh_ref, p_ref, e_ref,
                             gamma_ref, beta_ref, w1_ref, b1_ref, w2_ref, b2_ref,
                             lw_ref, lb_ref, o_ref, act_ref):
    """grid = (depth,).  One grid step == one FourierBlock (+ residual); the
    classification head runs on the final step.  Activations are carried in the
    VMEM scratch `act_ref` (layout (B, H, W*C)), so they never touch HBM between
    layers, and all DFT/helper matrices stay VMEM-resident."""
    layer = pl.program_id(0)
    n_layers = pl.num_programs(0)

    @pl.when(layer == 0)
    def _init():
        act_ref[...] = x_ref[...]

    B, H, WC = act_ref.shape
    C = e_ref.shape[0]
    W = WC // C

    a = act_ref[...]                                                  # (B, H, W*C)

    # ---- Fourier mixing: f = Re[ F_H ( (F_W (x) F_C) x ) ]  (== fft(fft2(x)).real)
    # step 1: contract the fused lane-dense (W,C) minor with kron(F_W, F_C);
    #         the batched 'bqd,bkd->bqk' form also pivots H into the minor slot.
    uR = jnp.einsum('bqd,bkd->bqk', kr_ref[...], a,
                    preferred_element_type=jnp.float32)               # (B, W*C, H)
    uI = -jnp.einsum('bqd,bkd->bqk', ki_ref[...], a,
                     preferred_element_type=jnp.float32)              # (B, W*C, H)
    # step 2: contract H with F_H, take the real part; pivots back to (B, H, W*C).
    f = (jnp.einsum('bqd,bkd->bqk', ch_ref[...], uR,
                    preferred_element_type=jnp.float32)
         + jnp.einsum('bqd,bkd->bqk', sh_ref[...], uI,
                      preferred_element_type=jnp.float32))            # (B, H, W*C)

    f2 = f.reshape(B * H, WC)
    x2 = a.reshape(B * H, WC)

    # ---- BatchNorm2d (training-mode batch statistics, biased var, eps=1e-5) ----
    # per-channel stats via the (W*C, C) sum matrix P and (C, W*C) expander E.
    n_el = B * H * W
    mean_c = jnp.dot(jnp.sum(f2, axis=0, keepdims=True), p_ref[...],
                     preferred_element_type=jnp.float32) / n_el       # (1, C)
    mean_wc = jnp.dot(mean_c, e_ref[...], preferred_element_type=jnp.float32)
    d = f2 - mean_wc
    var_c = jnp.dot(jnp.sum(d * d, axis=0, keepdims=True), p_ref[...],
                    preferred_element_type=jnp.float32) / n_el        # (1, C)
    scale_c = gamma_ref[0] * lax.rsqrt(var_c + 1e-5)                  # (1, C)
    scale_wc = jnp.dot(scale_c, e_ref[...], preferred_element_type=jnp.float32)
    shift_wc = jnp.dot(beta_ref[0], e_ref[...], preferred_element_type=jnp.float32)
    xn = d * scale_wc + shift_wc                                      # (B*H, W*C)

    # ---- FeedForward: 1x1 conv -> GELU -> 1x1 conv (block-diag kron'd weights,
    #      Dropout p=0 == identity) ----
    h = jnp.dot(xn, w1_ref[0], preferred_element_type=jnp.float32) + b1_ref[0]
    h = _gelu_exact(h)
    h = jnp.dot(h, w2_ref[0], preferred_element_type=jnp.float32) + b2_ref[0]

    # ---- residual (x = attn(x) + x), carried in VMEM across layers ----
    new_a = (h + x2).reshape(B, H, WC)
    act_ref[...] = new_a

    # ---- final layer only: AdaptiveAvgPool2d((1,1)) + Flatten + Linear ----
    @pl.when(layer == n_layers - 1)
    def _head():
        m = jnp.mean(new_a, axis=1)                                   # (B, W*C)
        pooled = jnp.dot(m, p_ref[...],
                         preferred_element_type=jnp.float32) / W      # (B, C)
        logits = (jnp.dot(pooled, lw_ref[...], preferred_element_type=jnp.float32)
                  + lb_ref[...])
        o_ref[...] = logits.astype(o_ref.dtype)


# ----------------------------------------------------------------------------
# Wrappers (pallas_call setup + JAX glue)
# ----------------------------------------------------------------------------
def conv3x3_nhwc(x, wmat, bias, *, tile_rows=512):
    """3x3 / stride 1 / pad 1 conv: im2col is JAX glue, the matmul is Pallas."""
    B, H, W, Cin = x.shape
    K, Cout = wmat.shape
    assert K == 9 * Cin
    xp = jnp.pad(x, ((0, 0), (1, 1), (1, 1), (0, 0)))
    cols = [xp[:, dy:dy + H, dx:dx + W, :] for dy in range(3) for dx in range(3)]
    patches = jnp.concatenate(cols, axis=-1).reshape(B * H * W, K)
    n = B * H * W
    tile = min(tile_rows, n)
    out = pl.pallas_call(
        _matmul_bias_kernel,
        out_shape=jax.ShapeDtypeStruct((n, Cout), jnp.float32),
        grid=(pl.cdiv(n, tile),),
        in_specs=[
            pl.BlockSpec((tile, K), lambda i: (i, 0)),
            pl.BlockSpec((K, Cout), lambda i: (0, 0)),
            pl.BlockSpec((1, Cout), lambda i: (0, 0)),
        ],
        out_specs=pl.BlockSpec((tile, Cout), lambda i: (i, 0)),
        compiler_params=pltpu.CompilerParams(dimension_semantics=("parallel",)),
    )(patches, wmat, bias)
    return out.reshape(B, H, W, Cout)


def _dft_cos_sin(n):
    # F[j,k] = exp(-2*pi*i*j*k/n) = cos - i*sin, exact integer phase.
    k = jnp.arange(n)
    phase = (k[:, None] * k[None, :]) % n
    ang = (2.0 * jnp.pi / n) * phase.astype(jnp.float32)
    return jnp.cos(ang), jnp.sin(ang)


def fourier_blocks_and_head(x_nhwc, params):
    """All FourierBlocks + residuals + pooled Linear head in ONE pallas_call."""
    B, H, W, C = x_nhwc.shape
    WC = W * C
    layers = params["layers"]
    depth = len(layers)
    num_classes = params["lin_w"].shape[1]

    # DFT matrices (f32 kept so the exact-DFT check stays tight; bf16 operands
    # with f32 accumulation would also fit the tolerance on v6e/v7x).
    ch, sh = _dft_cos_sin(H)
    cw, sw = _dft_cos_sin(W)
    cc, sc = _dft_cos_sin(C)
    kr = jnp.kron(cw, cc) - jnp.kron(sw, sc)     # Re kron(F_W, F_C)   (W*C, W*C)
    ki = jnp.kron(cw, sc) + jnp.kron(sw, cc)     # -Im kron(F_W, F_C)
    krb = jnp.broadcast_to(kr, (B, WC, WC))
    kib = jnp.broadcast_to(ki, (B, WC, WC))
    chb = jnp.broadcast_to(ch, (B, H, H))
    shb = jnp.broadcast_to(sh, (B, H, H))
    eye_c = jnp.eye(C, dtype=jnp.float32)
    p_mat = jnp.kron(jnp.ones((W, 1), jnp.float32), eye_c)   # (W*C, C): sum over w
    e_mat = jnp.kron(jnp.ones((1, W), jnp.float32), eye_c)   # (C, W*C): expand over w

    # per-layer params stacked along the grid axis; FF weights block-diagonalized.
    eye_w = jnp.eye(W, dtype=jnp.float32)
    gammas = jnp.stack([l["gamma"] for l in layers])                   # (L, 1, C)
    betas = jnp.stack([l["beta"] for l in layers])                     # (L, 1, C)
    w1k = jnp.stack([jnp.kron(eye_w, l["w1"]) for l in layers])        # (L, W*C, W*Cm)
    b1k = jnp.stack([jnp.tile(l["b1"], (1, W)) for l in layers])       # (L, 1, W*Cm)
    w2k = jnp.stack([jnp.kron(eye_w, l["w2"]) for l in layers])        # (L, W*Cm, W*C)
    b2k = jnp.stack([jnp.tile(l["b2"], (1, W)) for l in layers])       # (L, 1, W*C)
    WCm = w1k.shape[2]

    x = x_nhwc.reshape(B, H, WC)

    def const3(shape):
        return pl.BlockSpec(shape, lambda l: (0, 0, 0))

    def const2(shape):
        return pl.BlockSpec(shape, lambda l: (0, 0))

    def per_layer(shape):
        return pl.BlockSpec(shape, lambda l: (l, 0, 0))

    return pl.pallas_call(
        _fnet_blocks_head_kernel,
        out_shape=jax.ShapeDtypeStruct((B, num_classes), jnp.float32),
        grid=(depth,),
        in_specs=[
            const3((B, H, WC)),         # x
            const3((B, WC, WC)),        # kron cos
            const3((B, WC, WC)),        # kron sin
            const3((B, H, H)),          # CH
            const3((B, H, H)),          # SH
            const2((WC, C)),            # P  (per-channel sum)
            const2((C, WC)),            # E  (per-channel expand)
            per_layer((1, 1, C)),       # gamma
            per_layer((1, 1, C)),       # beta
            per_layer((1, WC, WCm)),    # kron(I_W, w1)
            per_layer((1, 1, WCm)),     # b1 tiled
            per_layer((1, WCm, WC)),    # kron(I_W, w2)
            per_layer((1, 1, WC)),      # b2 tiled
            const2((C, num_classes)),   # lin_w
            const2((1, num_classes)),   # lin_b
        ],
        out_specs=pl.BlockSpec((B, num_classes), lambda l: (0, 0)),
        scratch_shapes=[pltpu.VMEM((B, H, WC), jnp.float32)],
        compiler_params=pltpu.CompilerParams(
            dimension_semantics=("arbitrary",),
            vmem_limit_bytes=32 * 1024 * 1024),
    )(x, krb, kib, chb, shb, p_mat, e_mat,
      gammas, betas, w1k, b1k, w2k, b2k,
      params["lin_w"], params["lin_b"])


# ----------------------------------------------------------------------------
# Deterministic parameter init (shapes follow the PyTorch module __init__)
# ----------------------------------------------------------------------------
def init_params(key, *, final_dim=16, mlp_mult=1, depth=2, num_classes=10):
    mid = final_dim // 2
    ks = iter(jax.random.split(key, 6 + 6 * depth))

    def nrm(shape, scale):
        return scale * jax.random.normal(next(ks), shape, dtype=jnp.float32)

    params = {
        # stem conv weights stored as im2col matrices (9*Cin, Cout); row index
        # (dy*3+dx)*Cin + cin  <->  torch weight[cout, cin, dy, dx]
        "conv1_w": nrm((9 * 3, mid), (9 * 3) ** -0.5),
        "conv1_b": nrm((1, mid), 0.05),
        "conv2_w": nrm((9 * mid, final_dim), (9 * mid) ** -0.5),
        "conv2_b": nrm((1, final_dim), 0.05),
        "lin_w": nrm((final_dim, num_classes), final_dim ** -0.5),
        "lin_b": nrm((1, num_classes), 0.05),
        "layers": [],
    }
    cm = final_dim * mlp_mult
    for _ in range(depth):
        params["layers"].append({
            "gamma": 1.0 + nrm((1, final_dim), 0.1),        # BatchNorm2d weight
            "beta": nrm((1, final_dim), 0.1),               # BatchNorm2d bias
            "w1": nrm((final_dim, cm), final_dim ** -0.5),  # 1x1 conv (Cin, Cout)
            "b1": nrm((1, cm), 0.05),
            "w2": nrm((cm, final_dim), cm ** -0.5),
            "b2": nrm((1, final_dim), 0.05),
        })
    return params


# ----------------------------------------------------------------------------
# Full forward (Pallas) and pure-JAX reference
# ----------------------------------------------------------------------------
def fnet2d_forward(img_nchw, params):
    x = jnp.transpose(img_nchw, (0, 2, 3, 1)).astype(jnp.float32)     # NCHW -> NHWC
    x = conv3x3_nhwc(x, params["conv1_w"], params["conv1_b"])
    x = conv3x3_nhwc(x, params["conv2_w"], params["conv2_b"])
    return fourier_blocks_and_head(x, params)


def reference_forward(img_nchw, params):
    x = jnp.transpose(img_nchw, (0, 2, 3, 1)).astype(jnp.float32)
    cins = (3, params["conv1_w"].shape[1])
    for (wname, bname), cin in zip((("conv1_w", "conv1_b"), ("conv2_w", "conv2_b")), cins):
        wmat = params[wname]
        cout = wmat.shape[1]
        w_hwio = wmat.reshape(3, 3, cin, cout)
        x = lax.conv_general_dilated(
            x, w_hwio, window_strides=(1, 1), padding=((1, 1), (1, 1)),
            dimension_numbers=("NHWC", "HWIO", "NHWC")) + params[bname].reshape(1, 1, 1, cout)
    for layer in params["layers"]:
        f = jnp.fft.fft(jnp.fft.fft2(x, axes=(1, 2)), axis=-1).real
        mean = f.mean(axis=(0, 1, 2), keepdims=True)
        var = f.var(axis=(0, 1, 2), keepdims=True)
        xn = (f - mean) / jnp.sqrt(var + 1e-5)
        xn = xn * layer["gamma"].reshape(1, 1, 1, -1) + layer["beta"].reshape(1, 1, 1, -1)
        h = xn @ layer["w1"] + layer["b1"].reshape(1, 1, 1, -1)
        h = jax.nn.gelu(h, approximate=False)
        h = h @ layer["w2"] + layer["b2"].reshape(1, 1, 1, -1)
        x = h + x
    pooled = x.mean(axis=(1, 2))
    return pooled @ params["lin_w"] + params["lin_b"]


if __name__ == "__main__":
    key = jax.random.PRNGKey(0)
    k_img, k_par = jax.random.split(key)

    B, H, W = 2, 16, 16
    final_dim, depth, num_classes, mlp_mult = 16, 2, 10, 1

    img = jax.random.normal(k_img, (B, 3, H, W), dtype=jnp.float32)   # NCHW, like PyTorch
    params = init_params(k_par, final_dim=final_dim, mlp_mult=mlp_mult,
                         depth=depth, num_classes=num_classes)

    out = jax.block_until_ready(fnet2d_forward(img, params))
    assert out.shape == (B, num_classes) and out.dtype == jnp.float32

    ref = jax.block_until_ready(reference_forward(img, params))
    max_err = float(jnp.max(jnp.abs(out - ref)))
    if not bool(jnp.allclose(out, ref, rtol=2e-2, atol=2e-2)):
        raise AssertionError(f"Pallas output mismatch vs JAX reference (max abs err={max_err:.3e})")

    print("KERNEL_OK")
</pallas_src>

<mosaic_0001>
module attributes {stable_mosaic.version = 11 : i64} {
  func.func @_matmul_bias_kernel(%arg0: i32, %arg1: memref<512x27xf32, #tpu.memory_space<vmem>>, %arg2: memref<27x8xf32, #tpu.memory_space<vmem>>, %arg3: memref<1x8xf32, #tpu.memory_space<vmem>>, %arg4: memref<512x8xf32, #tpu.memory_space<vmem>>) attributes {dimension_semantics = [#tpu.dimension_semantics<parallel>], iteration_bounds = array<i64: 1>, scalar_prefetch = 0 : i64, scratch_operands = 0 : i64, tpu.core_type = #tpu.core_type<tc>, window_params = [{transform_indices = @transform_0, window_bounds = array<i64: 512, 27>}, {pipeline_mode = #tpu.pipeline_mode<synchronous>, transform_indices = @transform_1, window_bounds = array<i64: 27, 8>}, {pipeline_mode = #tpu.pipeline_mode<synchronous>, transform_indices = @transform_2, window_bounds = array<i64: 1, 8>}, {transform_indices = @transform_3, window_bounds = array<i64: 512, 8>}]} {
    %c0 = arith.constant 0 : index
    %c0_0 = arith.constant 0 : index
    %0 = vector.load %arg1[%c0, %c0_0] : memref<512x27xf32, #tpu.memory_space<vmem>>, vector<512x27xf32>
    %c0_1 = arith.constant 0 : index
    %c0_2 = arith.constant 0 : index
    %1 = vector.load %arg2[%c0_1, %c0_2] : memref<27x8xf32, #tpu.memory_space<vmem>>, vector<27x8xf32>
    %cst = arith.constant dense<0.000000e+00> : vector<512x8xf32>
    %2 = tpu.matmul %0, %1, %cst {dimension_numbers = #tpu.dot_dimension_numbers<[1], [0], [0], [1], [0, 0, 1, 1], [], []>} : vector<512x27xf32>, vector<27x8xf32>, vector<512x8xf32> -> vector<512x8xf32>
    %c0_3 = arith.constant 0 : index
    %c0_4 = arith.constant 0 : index
    %3 = vector.load %arg3[%c0_3, %c0_4] : memref<1x8xf32, #tpu.memory_space<vmem>>, vector<1x8xf32>
    %4 = vector.broadcast %3 : vector<1x8xf32> to vector<512x8xf32>
    %5 = arith.addf %2, %4 : vector<512x8xf32>
    %c0_5 = arith.constant 0 : index
    %c0_6 = arith.constant 0 : index
    %6 = vector.load %arg4[%c0_5, %c0_6] : memref<512x8xf32, #tpu.memory_space<vmem>>, vector<512x8xf32>
    tpu.vector_store %arg4[%c0_5, %c0_6], %5 {strides = array<i32>} : memref<512x8xf32, #tpu.memory_space<vmem>>, vector<512x8xf32>,
    return
  }
  func.func @transform_0(%arg0: i32) -> (i32, i32) {
    %c0_i32 = arith.constant 0 : i32
    %c0_i32_0 = arith.constant 0 : i32
    return %arg0, %c0_i32 : i32, i32
  }
  func.func @transform_1(%arg0: i32) -> (i32, i32) {
    %c0_i32 = arith.constant 0 : i32
    %c0_i32_0 = arith.constant 0 : i32
    %c0_i32_1 = arith.constant 0 : i32
    return %c0_i32, %c0_i32_0 : i32, i32
  }
  func.func @transform_2(%arg0: i32) -> (i32, i32) {
    %c0_i32 = arith.constant 0 : i32
    %c0_i32_0 = arith.constant 0 : i32
    %c0_i32_1 = arith.constant 0 : i32
    return %c0_i32, %c0_i32_0 : i32, i32
  }
  func.func @transform_3(%arg0: i32) -> (i32, i32) {
    %c0_i32 = arith.constant 0 : i32
    %c0_i32_0 = arith.constant 0 : i32
    return %arg0, %c0_i32 : i32, i32
  }
}

</mosaic_0001>

<llo_original>
// kernel: tpu_custom_call.1
$region0: #{tpu_custom_call.1}
  #allocation0 [shape = 'u32[]', space=smem, size = 0x4, offset = 0x4, fixed_abs, tag = 'smem constant byte address 0x4 - core index']
  #allocation1 [shape = 'u32[144,128]{1,0:T(1,128)}', space=vmem, size = 0x12000, scoped, tag = 'internal scratch']
  %s0 = inlined_call_operand.vmem [shape: f32[512,27], index: 0, kind: input, shape index: {}]
  %s1 = inlined_call_operand.vmem [shape: f32[27,8], index: 1, kind: input, shape index: {}]
  %s2 = inlined_call_operand.vmem [shape: f32[1,8], index: 2, kind: input, shape index: {}]
  %s3 = inlined_call_operand.vmem [shape: f32[512,8], index: 3, kind: output, shape index: {}]
  %s4 = sld [smem:[#allocation0]]
  $region22: #{tpu_custom_call.1} parent=0
    _
  %s6 = ssub.s32 1, %s4
  %s7 = scalar_select 0, %s6, %s4
  // Predicated region
  $region2: #{tpu_custom_call.1} parent=0 // pred_check
    _
  $region3: #{tpu_custom_call.1} parent=0 // pred_check_branch
    %9 = sbr.rel (0) target = $region5
  $region4: #{tpu_custom_call.1} parent=0 // pred_region
    _
  $region5: #{tpu_custom_call.1} parent=0 // pred_fallthru
    _
  // Predicated region
  $region6: #{tpu_custom_call.1} parent=0 // pred_check
    _
  $region7: #{tpu_custom_call.1} parent=0 // pred_check_branch
    %11 = sbr.rel (0) target = $region9
  $region8: #{tpu_custom_call.1} parent=0 // pred_region
    _
  $region9: #{tpu_custom_call.1} parent=0 // pred_fallthru
    _
  // Predicated region
  $region10: #{tpu_custom_call.1} parent=0 // pred_check
    _
  $region11: #{tpu_custom_call.1} parent=0 // pred_check_branch
    %13 = sbr.rel (0) target = $region13
  $region12: #{tpu_custom_call.1} parent=0 // pred_region
    _
  $region13: #{tpu_custom_call.1} parent=0 // pred_fallthru
    _
  %v14 = vld [vmem:[%s0] sm:$0xff]
  %v15 = vld [vmem:[%s0 + $0x8] sm:$0xff]
  %v16 = vld [vmem:[%s0 + $0x10] sm:$0xff]
  %v17 = vld [vmem:[%s0 + $0x18] sm:$0xff]
  %v18 = vld [vmem:[%s0 + $0x20] sm:$0xff]
  %v19 = vld [vmem:[%s0 + $0x28] sm:$0xff]
  %v20 = vld [vmem:[%s0 + $0x30] sm:$0xff]
  %v21 = vld [vmem:[%s0 + $0x38] sm:$0xff]
  %v22 = vld [vmem:[%s0 + $0x40] sm:$0xff]
  %v23 = vld [vmem:[%s0 + $0x48] sm:$0xff]
  %v24 = vld [vmem:[%s0 + $0x50] sm:$0xff]
  %v25 = vld [vmem:[%s0 + $0x58] sm:$0xff]
  %v26 = vld [vmem:[%s0 + $0x60] sm:$0xff]
  %v27 = vld [vmem:[%s0 + $0x68] sm:$0xff]
  %v28 = vld [vmem:[%s0 + $0x70] sm:$0xff]
  %v29 = vld [vmem:[%s0 + $0x78] sm:$0xff]
  %v30 = vld [vmem:[%s0 + $0x80] sm:$0xff]
  %v31 = vld [vmem:[%s0 + $0x88] sm:$0xff]
  %v32 = vld [vmem:[%s0 + $0x90] sm:$0xff]
  %v33 = vld [vmem:[%s0 + $0x98] sm:$0xff]
  %v34 = vld [vmem:[%s0 + $0xa0] sm:$0xff]
  %v35 = vld [vmem:[%s0 + $0xa8] sm:$0xff]
  %v36 = vld [vmem:[%s0 + $0xb0] sm:$0xff]
  %v37 = vld [vmem:[%s0 + $0xb8] sm:$0xff]
  %v38 = vld [vmem:[%s0 + $0xc0] sm:$0xff]
  %v39 = vld [vmem:[%s0 + $0xc8] sm:$0xff]
  %v40 = vld [vmem:[%s0 + $0xd0] sm:$0xff]
  %v41 = vld [vmem:[%s0 + $0xd8] sm:$0xff]
  %v42 = vld [vmem:[%s0 + $0xe0] sm:$0xff]
  %v43 = vld [vmem:[%s0 + $0xe8] sm:$0xff]
  %v44 = vld [vmem:[%s0 + $0xf0] sm:$0xff]
  %v45 = vld [vmem:[%s0 + $0xf8] sm:$0xff]
  %v46 = vld [vmem:[%s0 + $0x100] sm:$0xff]
  %v47 = vld [vmem:[%s0 + $0x108] sm:$0xff]
  %v48 = vld [vmem:[%s0 + $0x110] sm:$0xff]
  %v49 = vld [vmem:[%s0 + $0x118] sm:$0xff]
  %v50 = vld [vmem:[%s0 + $0x120] sm:$0xff]
  %v51 = vld [vmem:[%s0 + $0x128] sm:$0xff]
  %v52 = vld [vmem:[%s0 + $0x130] sm:$0xff]
  %v53 = vld [vmem:[%s0 + $0x138] sm:$0xff]
  %v54 = vld [vmem:[%s0 + $0x140] sm:$0xff]
  %v55 = vld [vmem:[%s0 + $0x148] sm:$0xff]
  %v56 = vld [vmem:[%s0 + $0x150] sm:$0xff]
  %v57 = vld [vmem:[%s0 + $0x158] sm:$0xff]
  %v58 = vld [vmem:[%s0 + $0x160] sm:$0xff]
  %v59 = vld [vmem:[%s0 + $0x168] sm:$0xff]
  %v60 = vld [vmem:[%s0 + $0x170] sm:$0xff]
  %v61 = vld [vmem:[%s0 + $0x178] sm:$0xff]
  %v62 = vld [vmem:[%s0 + $0x180] sm:$0xff]
  %v63 = vld [vmem:[%s0 + $0x188] sm:$0xff]
  %v64 = vld [vmem:[%s0 + $0x190] sm:$0xff]
  %v65 = vld [vmem:[%s0 + $0x198] sm:$0xff]
  %v66 = vld [vmem:[%s0 + $0x1a0] sm:$0xff]
  %v67 = vld [vmem:[%s0 + $0x1a8] sm:$0xff]
  %v68 = vld [vmem:[%s0 + $0x1b0] sm:$0xff]
  %v69 = vld [vmem:[%s0 + $0x1b8] sm:$0xff]
  %v70 = vld [vmem:[%s0 + $0x1c0] sm:$0xff]
  %v71 = vld [vmem:[%s0 + $0x1c8] sm:$0xff]
  %v72 = vld [vmem:[%s0 + $0x1d0] sm:$0xff]
  %v73 = vld [vmem:[%s0 + $0x1d8] sm:$0xff]
  %v74 = vld [vmem:[%s0 + $0x1e0] sm:$0xff]
  %v75 = vld [vmem:[%s0 + $0x1e8] sm:$0xff]
  %v76 = vld [vmem:[%s0 + $0x1f0] sm:$0xff]
  %v77 = vld [vmem:[%s0 + $0x1f8] sm:$0xff]
  %v78 = vld [vmem:[%s1] sm:$0xff]
  %v79 = vld [vmem:[%s1 + $0x8] sm:$0xff]
  %v80 = vld [vmem:[%s1 + $0x10] sm:$0xff]
  %v81 = vld [vmem:[%s1 + $0x18] sm:$0x7]
  %v82 = vld [vmem:[%s2] sm:$0x1]
  %v84 = vlaneseq
  %v85 = vshrl.u32 %v84, 7
  %v86 = vsub.s32 0, %v85
  %v87 = vrot.slane %v82, %v86
  %vm89 = vcmask 220160
  %v91 = vsel %vm89, %v14, 0
  %v94 = vsel %vm89, %v15, 0
  %v97 = vsel %vm89, %v16, 0
  %v100 = vsel %vm89, %v17, 0
  %v103 = vsel %vm89, %v18, 0
  %v106 = vsel %vm89, %v19, 0
  %v109 = vsel %vm89, %v20, 0
  %v112 = vsel %vm89, %v21, 0
  %v115 = vsel %vm89, %v22, 0
  %v118 = vsel %vm89, %v23, 0
  %v121 = vsel %vm89, %v24, 0
  %v124 = vsel %vm89, %v25, 0
  %v127 = vsel %vm89, %v26, 0
  %v130 = vsel %vm89, %v27, 0
  %v133 = vsel %vm89, %v28, 0
  %v136 = vsel %vm89, %v29, 0
  %v139 = vsel %vm89, %v30, 0
  %v142 = vsel %vm89, %v31, 0
  %v145 = vsel %vm89, %v32, 0
  %v148 = vsel %vm89, %v33, 0
  %v151 = vsel %vm89, %v34, 0
  %v154 = vsel %vm89, %v35, 0
  %v157 = vsel %vm89, %v36, 0
  %v160 = vsel %vm89, %v37, 0
  %v163 = vsel %vm89, %v38, 0
  %v166 = vsel %vm89, %v39, 0
  %v169 = vsel %vm89, %v40, 0
  %v172 = vsel %vm89, %v41, 0
  %v175 = vsel %vm89, %v42, 0
  %v178 = vsel %vm89, %v43, 0
  %v181 = vsel %vm89, %v44, 0
  %v184 = vsel %vm89, %v45, 0
  %v187 = vsel %vm89, %v46, 0
  %v190 = vsel %vm89, %v47, 0
  %v193 = vsel %vm89, %v48, 0
  %v196 = vsel %vm89, %v49, 0
  %v199 = vsel %vm89, %v50, 0
  %v202 = vsel %vm89, %v51, 0
  %v205 = vsel %vm89, %v52, 0
  %v208 = vsel %vm89, %v53, 0
  %v211 = vsel %vm89, %v54, 0
  %v214 = vsel %vm89, %v55, 0
  %v217 = vsel %vm89, %v56, 0
  %v220 = vsel %vm89, %v57, 0
  %v223 = vsel %vm89, %v58, 0
  %v226 = vsel %vm89, %v59, 0
  %v229 = vsel %vm89, %v60, 0
  %v232 = vsel %vm89, %v61, 0
  %v235 = vsel %vm89, %v62, 0
  %v238 = vsel %vm89, %v63, 0
  %v241 = vsel %vm89, %v64, 0
  %v244 = vsel %vm89, %v65, 0
  %v247 = vsel %vm89, %v66, 0
  %v250 = vsel %vm89, %v67, 0
  %v253 = vsel %vm89, %v68, 0
  %v256 = vsel %vm89, %v69, 0
  %v259 = vsel %vm89, %v70, 0
  %v262 = vsel %vm89, %v71, 0
  %v265 = vsel %vm89, %v72, 0
  %v268 = vsel %vm89, %v73, 0
  %v271 = vsel %vm89, %v74, 0
  %v274 = vsel %vm89, %v75, 0
  %v277 = vsel %vm89, %v76, 0
  %v280 = vsel %vm89, %v77, 0
  %vm282 = vcmask 1042432
  %v284 = vsel %vm282, %v81, 0
  %286 = vmatprep.subr.mxu0 0.0
  %287 = vmatpush1.msra.mxu0 0.0
  %288 = vmatprep.subr.mxu0 0.0
  %289 = vmatpush1.msra.mxu0 0.0
  %290 = vmatprep.subr.mxu0 0.0
  %291 = vmatpush1.msra.mxu0 0.0
  %292 = vmatprep.subr.mxu0 0.0
  %293 = vmatpush1.msra.mxu0 0.0
  %294 = vmatprep.subr.mxu0 0.0
  %295 = vmatpush1.msra.mxu0 0.0
  %296 = vmatprep.subr.mxu0 0.0
  %297 = vmatpush1.msra.mxu0 0.0
  %298 = vmatprep.subr.mxu0 0.0
  %299 = vmatpush1.msra.mxu0 0.0
  %300 = vmatprep.subr.mxu0 0.0
  %301 = vmatpush1.msra.mxu0 0.0
  %302 = vmatprep.subr.mxu0 0.0
  %303 = vmatpush1.msra.mxu0 0.0
  %304 = vmatprep.subr.mxu0 0.0
  %305 = vmatpush1.msra.mxu0 0.0
  %306 = vmatprep.subr.mxu0 0.0
  %307 = vmatpush1.msra.mxu0 0.0
  %308 = vmatprep.subr.mxu0 0.0
  %309 = vmatpush1.msra.mxu0 0.0
  %310 = vmatprep.subr.mxu0 0.0
  %311 = vmatpush1.msra.mxu0 %v284
  %312 = vmatprep.subr.mxu0 0.0
  %313 = vmatpush1.msra.mxu0 %v80
  %314 = vmatprep.subr.mxu0 0.0
  %315 = vmatpush1.msra.mxu0 %v79
  %316 = vmatprep.subr.mxu0 0.0
  %317 = vmatpush1.msra.mxu0 %v78
  %318 = vmatprep.subr.mxu0 0.0
  %319 = vmatpush2.msra.mxu0 0.0
  %320 = vmatprep.subr.mxu0 0.0
  %321 = vmatpush2.msra.mxu0 0.0
  %322 = vmatprep.subr.mxu0 0.0
  %323 = vmatpush2.msra.mxu0 0.0
  %324 = vmatprep.subr.mxu0 0.0
  %325 = vmatpush2.msra.mxu0 0.0
  %326 = vmatprep.subr.mxu0 0.0
  %327 = vmatpush2.msra.mxu0 0.0
  %328 = vmatprep.subr.mxu0 0.0
  %329 = vmatpush2.msra.mxu0 0.0
  %330 = vmatprep.subr.mxu0 0.0
  %331 = vmatpush2.msra.mxu0 0.0
  %332 = vmatprep.subr.mxu0 0.0
  %333 = vmatpush2.msra.mxu0 0.0
  %334 = vmatprep.subr.mxu0 0.0
  %335 = vmatpush2.msra.mxu0 0.0
  %336 = vmatprep.subr.mxu0 0.0
  %337 = vmatpush2.msra.mxu0 0.0
  %338 = vmatprep.subr.mxu0 0.0
  %339 = vmatpush2.msra.mxu0 0.0
  %340 = vmatprep.subr.mxu0 0.0
  %341 = vmatpush2.msra.mxu0 0.0
  %342 = vmatprep.subr.mxu0 0.0
  %343 = vmatpush2.msra.mxu0 0.0
  %344 = vmatprep.subr.mxu0 0.0
  %345 = vmatpush2.msra.mxu0 0.0
  %346 = vmatprep.subr.mxu0 0.0
  %347 = vmatpush2.msra.mxu0 0.0
  %348 = vmatprep.subr.mxu0 0.0
  %349 = vmatpush2.msra.mxu0 0.0
  %350 = vmatprep.mubr.f32.mxu0 0.0
  %351 = vmatmul.mubr.f32.gmra.mxu0 %v91
  %v352 = vpop.f32.mrf.mxu0
  %v353 = vadd.f32 %v87, %v352
  %v354 = vpop.f32.mrf.mxu0
  %355 = vmatprep.mubr.f32.mxu0 0.0
  %356 = vmatmul.mubr.f32.gmra.mxu0 %v94
  %v357 = vpop.f32.mrf.mxu0
  %v358 = vadd.f32 %v87, %v357
  %v359 = vpop.f32.mrf.mxu0
  %360 = vmatprep.mubr.f32.mxu0 0.0
  %361 = vmatmul.mubr.f32.gmra.mxu0 %v97
  %v362 = vpop.f32.mrf.mxu0
  %v363 = vadd.f32 %v87, %v362
  %v364 = vpop.f32.mrf.mxu0
  %365 = vmatprep.mubr.f32.mxu0 0.0
  %366 = vmatmul.mubr.f32.gmra.mxu0 %v100
  %v367 = vpop.f32.mrf.mxu0
  %v368 = vadd.f32 %v87, %v367
  %v369 = vpop.f32.mrf.mxu0
  %370 = vmatprep.mubr.f32.mxu0 0.0
  %371 = vmatmul.mubr.f32.gmra.mxu0 %v103
  %v372 = vpop.f32.mrf.mxu0
  %v373 = vadd.f32 %v87, %v372
  %v374 = vpop.f32.mrf.mxu0
  %375 = vmatprep.mubr.f32.mxu0 0.0
  %376 = vmatmul.mubr.f32.gmra.mxu0 %v106
  %v377 = vpop.f32.mrf.mxu0
  %v378 = vadd.f32 %v87, %v377
  %v379 = vpop.f32.mrf.mxu0
  %380 = vmatprep.mubr.f32.mxu0 0.0
  %381 = vmatmul.mubr.f32.gmra.mxu0 %v109
  %v382 = vpop.f32.mrf.mxu0
  %v383 = vadd.f32 %v87, %v382
  %v384 = vpop.f32.mrf.mxu0
  %385 = vmatprep.mubr.f32.mxu0 0.0
  %386 = vmatmul.mubr.f32.gmra.mxu0 %v112
  %v387 = vpop.f32.mrf.mxu0
  %v388 = vadd.f32 %v87, %v387
  %v389 = vpop.f32.mrf.mxu0
  %390 = vmatprep.mubr.f32.mxu0 0.0
  %391 = vmatmul.mubr.f32.gmra.mxu0 %v115
  %v392 = vpop.f32.mrf.mxu0
  %v393 = vadd.f32 %v87, %v392
  %v394 = vpop.f32.mrf.mxu0
  %395 = vmatprep.mubr.f32.mxu0 0.0
  %396 = vmatmul.mubr.f32.gmra.mxu0 %v118
  %v397 = vpop.f32.mrf.mxu0
  %v398 = vadd.f32 %v87, %v397
  %v399 = vpop.f32.mrf.mxu0
  %400 = vmatprep.mubr.f32.mxu0 0.0
  %401 = vmatmul.mubr.f32.gmra.mxu0 %v121
  %v402 = vpop.f32.mrf.mxu0
  %v403 = vadd.f32 %v87, %v402
  %v404 = vpop.f32.mrf.mxu0
  %405 = vmatprep.mubr.f32.mxu0 0.0
  %406 = vmatmul.mubr.f32.gmra.mxu0 %v124
  %v407 = vpop.f32.mrf.mxu0
  %v408 = vadd.f32 %v87, %v407
  %v409 = vpop.f32.mrf.mxu0
  %410 = vmatprep.mubr.f32.mxu0 0.0
  %411 = vmatmul.mubr.f32.gmra.mxu0 %v127
  %v412 = vpop.f32.mrf.mxu0
  %v413 = vadd.f32 %v87, %v412
  %v414 = vpop.f32.mrf.mxu0
  %415 = vmatprep.mubr.f32.mxu0 0.0
  %416 = vmatmul.mubr.f32.gmra.mxu0 %v130
  %v417 = vpop.f32.mrf.mxu0
  %v418 = vadd.f32 %v87, %v417
  %v419 = vpop.f32.mrf.mxu0
  %420 = vmatprep.mubr.f32.mxu0 0.0
  %421 = vmatmul.mubr.f32.gmra.mxu0 %v133
  %v422 = vpop.f32.mrf.mxu0
  %v423 = vadd.f32 %v87, %v422
  %v424 = vpop.f32.mrf.mxu0
  %425 = vmatprep.mubr.f32.mxu0 0.0
  %426 = vmatmul.mubr.f32.gmra.mxu0 %v136
  %v427 = vpop.f32.mrf.mxu0
  %v428 = vadd.f32 %v87, %v427
  %v429 = vpop.f32.mrf.mxu0
  %430 = vmatprep.mubr.f32.mxu0 0.0
  %431 = vmatmul.mubr.f32.gmra.mxu0 %v139
  %v432 = vpop.f32.mrf.mxu0
  %v433 = vadd.f32 %v87, %v432
  %v434 = vpop.f32.mrf.mxu0
  %435 = vmatprep.mubr.f32.mxu0 0.0
  %436 = vmatmul.mubr.f32.gmra.mxu0 %v142
  %v437 = vpop.f32.mrf.mxu0
  %v438 = vadd.f32 %v87, %v437
  %v439 = vpop.f32.mrf.mxu0
  %440 = vmatprep.mubr.f32.mxu0 0.0
  %441 = vmatmul.mubr.f32.gmra.mxu0 %v145
  %v442 = vpop.f32.mrf.mxu0
  %v443 = vadd.f32 %v87, %v442
  %v444 = vpop.f32.mrf.mxu0
  %445 = vmatprep.mubr.f32.mxu0 0.0
  %446 = vmatmul.mubr.f32.gmra.mxu0 %v148
  %v447 = vpop.f32.mrf.mxu0
  %v448 = vadd.f32 %v87, %v447
  %v449 = vpop.f32.mrf.mxu0
  %450 = vmatprep.mubr.f32.mxu0 0.0
  %451 = vmatmul.mubr.f32.gmra.mxu0 %v151
  %v452 = vpop.f32.mrf.mxu0
  %v453 = vadd.f32 %v87, %v452
  %v454 = vpop.f32.mrf.mxu0
  %455 = vmatprep.mubr.f32.mxu0 0.0
  %456 = vmatmul.mubr.f32.gmra.mxu0 %v154
  %v457 = vpop.f32.mrf.mxu0
  %v458 = vadd.f32 %v87, %v457
  %v459 = vpop.f32.mrf.mxu0
  %460 = vmatprep.mubr.f32.mxu0 0.0
  %461 = vmatmul.mubr.f32.gmra.mxu0 %v157
  %v462 = vpop.f32.mrf.mxu0
  %v463 = vadd.f32 %v87, %v462
  %v464 = vpop.f32.mrf.mxu0
  %465 = vmatprep.mubr.f32.mxu0 0.0
  %466 = vmatmul.mubr.f32.gmra.mxu0 %v160
  %v467 = vpop.f32.mrf.mxu0
  %v468 = vadd.f32 %v87, %v467
  %v469 = vpop.f32.mrf.mxu0
  %470 = vmatprep.mubr.f32.mxu0 0.0
  %471 = vmatmul.mubr.f32.gmra.mxu0 %v163
  %v472 = vpop.f32.mrf.mxu0
  %v473 = vadd.f32 %v87, %v472
  %v474 = vpop.f32.mrf.mxu0
  %475 = vmatprep.mubr.f32.mxu0 0.0
  %476 = vmatmul.mubr.f32.gmra.mxu0 %v166
  %v477 = vpop.f32.mrf.mxu0
  %v478 = vadd.f32 %v87, %v477
  %v479 = vpop.f32.mrf.mxu0
  %480 = vmatprep.mubr.f32.mxu0 0.0
  %481 = vmatmul.mubr.f32.gmra.mxu0 %v169
  %v482 = vpop.f32.mrf.mxu0
  %v483 = vadd.f32 %v87, %v482
  %v484 = vpop.f32.mrf.mxu0
  %485 = vmatprep.mubr.f32.mxu0 0.0
  %486 = vmatmul.mubr.f32.gmra.mxu0 %v172
  %v487 = vpop.f32.mrf.mxu0
  %v488 = vadd.f32 %v87, %v487
  %v489 = vpop.f32.mrf.mxu0
  %490 = vmatprep.mubr.f32.mxu0 0.0
  %491 = vmatmul.mubr.f32.gmra.mxu0 %v175
  %v492 = vpop.f32.mrf.mxu0
  %v493 = vadd.f32 %v87, %v492
  %v494 = vpop.f32.mrf.mxu0
  %495 = vmatprep.mubr.f32.mxu0 0.0
  %496 = vmatmul.mubr.f32.gmra.mxu0 %v178
  %v497 = vpop.f32.mrf.mxu0
  %v498 = vadd.f32 %v87, %v497
  %v499 = vpop.f32.mrf.mxu0
  %500 = vmatprep.mubr.f32.mxu0 0.0
  %501 = vmatmul.mubr.f32.gmra.mxu0 %v181
  %v502 = vpop.f32.mrf.mxu0
  %v503 = vadd.f32 %v87, %v502
  %v504 = vpop.f32.mrf.mxu0
  %505 = vmatprep.mubr.f32.mxu0 0.0
  %506 = vmatmul.mubr.f32.gmra.mxu0 %v184
  %v507 = vpop.f32.mrf.mxu0
  %v508 = vadd.f32 %v87, %v507
  %v509 = vpop.f32.mrf.mxu0
  %510 = vmatprep.mubr.f32.mxu0 0.0
  %511 = vmatmul.mubr.f32.gmra.mxu0 %v187
  %v512 = vpop.f32.mrf.mxu0
  %v513 = vadd.f32 %v87, %v512
  %v514 = vpop.f32.mrf.mxu0
  %515 = vmatprep.mubr.f32.mxu0 0.0
  %516 = vmatmul.mubr.f32.gmra.mxu0 %v190
  %v517 = vpop.f32.mrf.mxu0
  %v518 = vadd.f32 %v87, %v517
  %v519 = vpop.f32.mrf.mxu0
  %520 = vmatprep.mubr.f32.mxu0 0.0
  %521 = vmatmul.mubr.f32.gmra.mxu0 %v193
  %v522 = vpop.f32.mrf.mxu0
  %v523 = vadd.f32 %v87, %v522
  %v524 = vpop.f32.mrf.mxu0
  %525 = vmatprep.mubr.f32.mxu0 0.0
  %526 = vmatmul.mubr.f32.gmra.mxu0 %v196
  %v527 = vpop.f32.mrf.mxu0
  %v528 = vadd.f32 %v87, %v527
  %v529 = vpop.f32.mrf.mxu0
  %530 = vmatprep.mubr.f32.mxu0 0.0
  %531 = vmatmul.mubr.f32.gmra.mxu0 %v199
  %v532 = vpop.f32.mrf.mxu0
  %v533 = vadd.f32 %v87, %v532
  %v534 = vpop.f32.mrf.mxu0
  %535 = vmatprep.mubr.f32.mxu0 0.0
  %536 = vmatmul.mubr.f32.gmra.mxu0 %v202
  %v537 = vpop.f32.mrf.mxu0
  %v538 = vadd.f32 %v87, %v537
  %v539 = vpop.f32.mrf.mxu0
  %540 = vmatprep.mubr.f32.mxu0 0.0
  %541 = vmatmul.mubr.f32.gmra.mxu0 %v205
  %v542 = vpop.f32.mrf.mxu0
  %v543 = vadd.f32 %v87, %v542
  %v544 = vpop.f32.mrf.mxu0
  %545 = vmatprep.mubr.f32.mxu0 0.0
  %546 = vmatmul.mubr.f32.gmra.mxu0 %v208
  %v547 = vpop.f32.mrf.mxu0
  %v548 = vadd.f32 %v87, %v547
  %v549 = vpop.f32.mrf.mxu0
  %550 = vmatprep.mubr.f32.mxu0 0.0
  %551 = vmatmul.mubr.f32.gmra.mxu0 %v211
  %v552 = vpop.f32.mrf.mxu0
  %v553 = vadd.f32 %v87, %v552
  %v554 = vpop.f32.mrf.mxu0
  %555 = vmatprep.mubr.f32.mxu0 0.0
  %556 = vmatmul.mubr.f32.gmra.mxu0 %v214
  %v557 = vpop.f32.mrf.mxu0
  %v558 = vadd.f32 %v87, %v557
  %v559 = vpop.f32.mrf.mxu0
  %560 = vmatprep.mubr.f32.mxu0 0.0
  %561 = vmatmul.mubr.f32.gmra.mxu0 %v217
  %v562 = vpop.f32.mrf.mxu0
  %v563 = vadd.f32 %v87, %v562
  %v564 = vpop.f32.mrf.mxu0
  %565 = vmatprep.mubr.f32.mxu0 0.0
  %566 = vmatmul.mubr.f32.gmra.mxu0 %v220
  %v567 = vpop.f32.mrf.mxu0
  %v568 = vadd.f32 %v87, %v567
  %v569 = vpop.f32.mrf.mxu0
  %570 = vmatprep.mubr.f32.mxu0 0.0
  %571 = vmatmul.mubr.f32.gmra.mxu0 %v223
  %v572 = vpop.f32.mrf.mxu0
  %v573 = vadd.f32 %v87, %v572
  %v574 = vpop.f32.mrf.mxu0
  %575 = vmatprep.mubr.f32.mxu0 0.0
  %576 = vmatmul.mubr.f32.gmra.mxu0 %v226
  %v577 = vpop.f32.mrf.mxu0
  %v578 = vadd.f32 %v87, %v577
  %v579 = vpop.f32.mrf.mxu0
  %580 = vmatprep.mubr.f32.mxu0 0.0
  %581 = vmatmul.mubr.f32.gmra.mxu0 %v229
  %v582 = vpop.f32.mrf.mxu0
  %v583 = vadd.f32 %v87, %v582
  %v584 = vpop.f32.mrf.mxu0
  %585 = vmatprep.mubr.f32.mxu0 0.0
  %586 = vmatmul.mubr.f32.gmra.mxu0 %v232
  %v587 = vpop.f32.mrf.mxu0
  %v588 = vadd.f32 %v87, %v587
  %v589 = vpop.f32.mrf.mxu0
  %590 = vmatprep.mubr.f32.mxu0 0.0
  %591 = vmatmul.mubr.f32.gmra.mxu0 %v235
  %v592 = vpop.f32.mrf.mxu0
  %v593 = vadd.f32 %v87, %v592
  %v594 = vpop.f32.mrf.mxu0
  %595 = vmatprep.mubr.f32.mxu0 0.0
  %596 = vmatmul.mubr.f32.gmra.mxu0 %v238
  %v597 = vpop.f32.mrf.mxu0
  %v598 = vadd.f32 %v87, %v597
  %v599 = vpop.f32.mrf.mxu0
  %600 = vmatprep.mubr.f32.mxu0 0.0
  %601 = vmatmul.mubr.f32.gmra.mxu0 %v241
  %v602 = vpop.f32.mrf.mxu0
  %v603 = vadd.f32 %v87, %v602
  %v604 = vpop.f32.mrf.mxu0
  %605 = vmatprep.mubr.f32.mxu0 0.0
  %606 = vmatmul.mubr.f32.gmra.mxu0 %v244
  %v607 = vpop.f32.mrf.mxu0
  %v608 = vadd.f32 %v87, %v607
  %v609 = vpop.f32.mrf.mxu0
  %610 = vmatprep.mubr.f32.mxu0 0.0
  %611 = vmatmul.mubr.f32.gmra.mxu0 %v247
  %v612 = vpop.f32.mrf.mxu0
  %v613 = vadd.f32 %v87, %v612
  %v614 = vpop.f32.mrf.mxu0
  %615 = vmatprep.mubr.f32.mxu0 0.0
  %616 = vmatmul.mubr.f32.gmra.mxu0 %v250
  %v617 = vpop.f32.mrf.mxu0
  %v618 = vadd.f32 %v87, %v617
  %v619 = vpop.f32.mrf.mxu0
  %620 = vmatprep.mubr.f32.mxu0 0.0
  %621 = vmatmul.mubr.f32.gmra.mxu0 %v253
  %v622 = vpop.f32.mrf.mxu0
  %v623 = vadd.f32 %v87, %v622
  %v624 = vpop.f32.mrf.mxu0
  %625 = vmatprep.mubr.f32.mxu0 0.0
  %626 = vmatmul.mubr.f32.gmra.mxu0 %v256
  %v627 = vpop.f32.mrf.mxu0
  %v628 = vadd.f32 %v87, %v627
  %v629 = vpop.f32.mrf.mxu0
  %630 = vmatprep.mubr.f32.mxu0 0.0
  %631 = vmatmul.mubr.f32.gmra.mxu0 %v259
  %v632 = vpop.f32.mrf.mxu0
  %v633 = vadd.f32 %v87, %v632
  %v634 = vpop.f32.mrf.mxu0
  %635 = vmatprep.mubr.f32.mxu0 0.0
  %636 = vmatmul.mubr.f32.gmra.mxu0 %v262
  %v637 = vpop.f32.mrf.mxu0
  %v638 = vadd.f32 %v87, %v637
  %v639 = vpop.f32.mrf.mxu0
  %640 = vmatprep.mubr.f32.mxu0 0.0
  %641 = vmatmul.mubr.f32.gmra.mxu0 %v265
  %v642 = vpop.f32.mrf.mxu0
  %v643 = vadd.f32 %v87, %v642
  %v644 = vpop.f32.mrf.mxu0
  %645 = vmatprep.mubr.f32.mxu0 0.0
  %646 = vmatmul.mubr.f32.gmra.mxu0 %v268
  %v647 = vpop.f32.mrf.mxu0
  %v648 = vadd.f32 %v87, %v647
  %v649 = vpop.f32.mrf.mxu0
  %650 = vmatprep.mubr.f32.mxu0 0.0
  %651 = vmatmul.mubr.f32.gmra.mxu0 %v271
  %v652 = vpop.f32.mrf.mxu0
  %v653 = vadd.f32 %v87, %v652
  %v654 = vpop.f32.mrf.mxu0
  %655 = vmatprep.mubr.f32.mxu0 0.0
  %656 = vmatmul.mubr.f32.gmra.mxu0 %v274
  %v657 = vpop.f32.mrf.mxu0
  %v658 = vadd.f32 %v87, %v657
  %v659 = vpop.f32.mrf.mxu0
  %660 = vmatprep.mubr.f32.mxu0 0.0
  %661 = vmatmul.mubr.f32.gmra.mxu0 %v277
  %v662 = vpop.f32.mrf.mxu0
  %v663 = vadd.f32 %v87, %v662
  %v664 = vpop.f32.mrf.mxu0
  %665 = vmatprep.mubr.f32.mxu0 0.0
  %666 = vmatmul.mubr.f32.gmra.mxu0 %v280
  %v667 = vpop.f32.mrf.mxu0
  %v668 = vadd.f32 %v87, %v667
  %v669 = vpop.f32.mrf.mxu0
  %670 = vdwg.mxu0
  %vm671 = vcmask 64512
  %672 = vst.msk [vmem:[%s3] sm:$0xff] %vm671, %v353
  %673 = vst.msk [vmem:[%s3 + $0x8] sm:$0xff] %vm671, %v358
  %674 = vst.msk [vmem:[%s3 + $0x10] sm:$0xff] %vm671, %v363
  %675 = vst.msk [vmem:[%s3 + $0x18] sm:$0xff] %vm671, %v368
  %676 = vst.msk [vmem:[%s3 + $0x20] sm:$0xff] %vm671, %v373
  %677 = vst.msk [vmem:[%s3 + $0x28] sm:$0xff] %vm671, %v378
  %678 = vst.msk [vmem:[%s3 + $0x30] sm:$0xff] %vm671, %v383
  %679 = vst.msk [vmem:[%s3 + $0x38] sm:$0xff] %vm671, %v388
  %680 = vst.msk [vmem:[%s3 + $0x40] sm:$0xff] %vm671, %v393
  %681 = vst.msk [vmem:[%s3 + $0x48] sm:$0xff] %vm671, %v398
  %682 = vst.msk [vmem:[%s3 + $0x50] sm:$0xff] %vm671, %v403
  %683 = vst.msk [vmem:[%s3 + $0x58] sm:$0xff] %vm671, %v408
  %684 = vst.msk [vmem:[%s3 + $0x60] sm:$0xff] %vm671, %v413
  %685 = vst.msk [vmem:[%s3 + $0x68] sm:$0xff] %vm671, %v418
  %686 = vst.msk [vmem:[%s3 + $0x70] sm:$0xff] %vm671, %v423
  %687 = vst.msk [vmem:[%s3 + $0x78] sm:$0xff] %vm671, %v428
  %688 = vst.msk [vmem:[%s3 + $0x80] sm:$0xff] %vm671, %v433
  %689 = vst.msk [vmem:[%s3 + $0x88] sm:$0xff] %vm671, %v438
  %690 = vst.msk [vmem:[%s3 + $0x90] sm:$0xff] %vm671, %v443
  %691 = vst.msk [vmem:[%s3 + $0x98] sm:$0xff] %vm671, %v448
  %692 = vst.msk [vmem:[%s3 + $0xa0] sm:$0xff] %vm671, %v453
  %693 = vst.msk [vmem:[%s3 + $0xa8] sm:$0xff] %vm671, %v458
  %694 = vst.msk [vmem:[%s3 + $0xb0] sm:$0xff] %vm671, %v463
  %695 = vst.msk [vmem:[%s3 + $0xb8] sm:$0xff] %vm671, %v468
  %696 = vst.msk [vmem:[%s3 + $0xc0] sm:$0xff] %vm671, %v473
  %697 = vst.msk [vmem:[%s3 + $0xc8] sm:$0xff] %vm671, %v478
  %698 = vst.msk [vmem:[%s3 + $0xd0] sm:$0xff] %vm671, %v483
  %699 = vst.msk [vmem:[%s3 + $0xd8] sm:$0xff] %vm671, %v488
  %700 = vst.msk [vmem:[%s3 + $0xe0] sm:$0xff] %vm671, %v493
  %701 = vst.msk [vmem:[%s3 + $0xe8] sm:$0xff] %vm671, %v498
  %702 = vst.msk [vmem:[%s3 + $0xf0] sm:$0xff] %vm671, %v503
  %703 = vst.msk [vmem:[%s3 + $0xf8] sm:$0xff] %vm671, %v508
  %704 = vst.msk [vmem:[%s3 + $0x100] sm:$0xff] %vm671, %v513
  %705 = vst.msk [vmem:[%s3 + $0x108] sm:$0xff] %vm671, %v518
  %706 = vst.msk [vmem:[%s3 + $0x110] sm:$0xff] %vm671, %v523
  %707 = vst.msk [vmem:[%s3 + $0x118] sm:$0xff] %vm671, %v528
  %708 = vst.msk [vmem:[%s3 + $0x120] sm:$0xff] %vm671, %v533
  %709 = vst.msk [vmem:[%s3 + $0x128] sm:$0xff] %vm671, %v538
  %710 = vst.msk [vmem:[%s3 + $0x130] sm:$0xff] %vm671, %v543
  %711 = vst.msk [vmem:[%s3 + $0x138] sm:$0xff] %vm671, %v548
  %712 = vst.msk [vmem:[%s3 + $0x140] sm:$0xff] %vm671, %v553
  %713 = vst.msk [vmem:[%s3 + $0x148] sm:$0xff] %vm671, %v558
  %714 = vst.msk [vmem:[%s3 + $0x150] sm:$0xff] %vm671, %v563
  %715 = vst.msk [vmem:[%s3 + $0x158] sm:$0xff] %vm671, %v568
  %716 = vst.msk [vmem:[%s3 + $0x160] sm:$0xff] %vm671, %v573
  %717 = vst.msk [vmem:[%s3 + $0x168] sm:$0xff] %vm671, %v578
  %718 = vst.msk [vmem:[%s3 + $0x170] sm:$0xff] %vm671, %v583
  %719 = vst.msk [vmem:[%s3 + $0x178] sm:$0xff] %vm671, %v588
  %720 = vst.msk [vmem:[%s3 + $0x180] sm:$0xff] %vm671, %v593
  %721 = vst.msk [vmem:[%s3 + $0x188] sm:$0xff] %vm671, %v598
  %722 = vst.msk [vmem:[%s3 + $0x190] sm:$0xff] %vm671, %v603
  %723 = vst.msk [vmem:[%s3 + $0x198] sm:$0xff] %vm671, %v608
  %724 = vst.msk [vmem:[%s3 + $0x1a0] sm:$0xff] %vm671, %v613
  %725 = vst.msk [vmem:[%s3 + $0x1a8] sm:$0xff] %vm671, %v618
  %726 = vst.msk [vmem:[%s3 + $0x1b0] sm:$0xff] %vm671, %v623
  %727 = vst.msk [vmem:[%s3 + $0x1b8] sm:$0xff] %vm671, %v628
  %728 = vst.msk [vmem:[%s3 + $0x1c0] sm:$0xff] %vm671, %v633
  %729 = vst.msk [vmem:[%s3 + $0x1c8] sm:$0xff] %vm671, %v638
  %730 = vst.msk [vmem:[%s3 + $0x1d0] sm:$0xff] %vm671, %v643
  %731 = vst.msk [vmem:[%s3 + $0x1d8] sm:$0xff] %vm671, %v648
  %732 = vst.msk [vmem:[%s3 + $0x1e0] sm:$0xff] %vm671, %v653
  %733 = vst.msk [vmem:[%s3 + $0x1e8] sm:$0xff] %vm671, %v658
  %734 = vst.msk [vmem:[%s3 + $0x1f0] sm:$0xff] %vm671, %v663
  %735 = vst.msk [vmem:[%s3 + $0x1f8] sm:$0xff] %vm671, %v668
  // Predicated region
  $region14: #{tpu_custom_call.1} parent=0 // pred_check
    _
  $region15: #{tpu_custom_call.1} parent=0 // pred_check_branch
    %737 = sbr.rel (0) target = $region17
  $region16: #{tpu_custom_call.1} parent=0 // pred_region
    _
  $region17: #{tpu_custom_call.1} parent=0 // pred_fallthru
    _
  // Predicated region
  $region18: #{tpu_custom_call.1} parent=0 // pred_check
    _
  $region19: #{tpu_custom_call.1} parent=0 // pred_check_branch
    %739 = sbr.rel (0) target = $region21
  $region20: #{tpu_custom_call.1} parent=0 // pred_region
    _
  $region21: #{tpu_custom_call.1} parent=0 // pred_fallthru
    _

</llo_original>
